<compile_context>
chip_gen: v7x
topology: tpu7x:2x2x1
jax: 0.10.0
libtpu: 0.0.40
codegen_flags: <defaults>
</compile_context>

<pallas_src>
from functools import partial

import jax
import jax.numpy as jnp
from jax.experimental import pallas as pl
from jax.experimental.pallas import tpu as pltpu

EPS = 1e-5  # InstanceNorm2d default eps


def upsampling_block_kernel(x_ref, w_ref, s_ref, o_ref):
    """Fused conv-transpose (one MXU dot) + InstanceNorm2d + Dropout2d + ReLU.

    x_ref: (1, nb*K*K*C_in, HW)    bf16 im2col patches, nb images stacked on rows
    w_ref: (nb*C_out, nb*K*K*C_in) bf16 block-diag flipped ConvTranspose weight
    s_ref: (1, nb*C_out, 1)        f32 dropout keep-mask * 1/(1-p)
    o_ref: (1, nb*C_out, HW)       f32 output
    """
    # ---- transposed convolution: single channel-major bf16 matmul on the MXU ----
    y = jnp.dot(w_ref[...], x_ref[0], preferred_element_type=jnp.float32)

    # ---- fused InstanceNorm2d + Dropout2d scale + ReLU (single pass over y) ----
    # Conv bias is deliberately omitted: the mean subtraction below cancels a
    # per-channel constant exactly (affine=False), so it would be dead compute.
    inv_hw = jnp.float32(1.0 / y.shape[1])
    mean = jnp.sum(y, axis=1, keepdims=True) * inv_hw          # (nb*C_out, 1)
    mean_sq = jnp.sum(y * y, axis=1, keepdims=True) * inv_hw
    var = jnp.maximum(mean_sq - mean * mean, 0.0)               # clamp f32 cancellation
    scale = jax.lax.rsqrt(var + EPS) * s_ref[0]                 # norm * dropout scale
    o_ref[0] = jnp.maximum((y - mean) * scale, 0.0).astype(o_ref.dtype)


def images_per_step(n_batch):
    """nb=1 on multi-TensorCore chips (v7x / megacore v4/v5p) so the 'parallel'
    batch axis shards one image per core; nb=N on single-TC chips (v5e/v6e) to
    merge the batch into one grid step (saves ~0.35us/step pipeline overhead)."""
    try:
        kind = jax.devices()[0].device_kind.lower()
    except Exception:
        return n_batch
    if any(tag in kind for tag in ("v7", "v4", "v5p")):
        return 1
    return n_batch


def prepare_conv_weight(weight, *, kernel_size, images_per_step):
    """One-time weight prep (hoisted out of the per-call traced path).

    ConvTranspose2d weight (C_in, C_out, K, K) -> spatially flipped correlation
    weight, flattened so column index = ci*K*K + kh*K + kw (matching
    jax.lax.conv_general_dilated_patches ordering), replicated block-diagonally
    for `images_per_step` images, cast to bf16 for the MXU.
    The conv bias is dropped: InstanceNorm cancels it exactly.
    """
    C_in, C_out, K, _ = weight.shape
    assert K == kernel_size
    w_corr = weight[:, :, ::-1, ::-1]                               # flip -> correlation
    w_flat = jnp.transpose(w_corr, (1, 0, 2, 3)).reshape(C_out, C_in * K * K)
    if images_per_step > 1:
        w_flat = jnp.kron(jnp.eye(images_per_step, dtype=w_flat.dtype), w_flat)
    return w_flat.astype(jnp.bfloat16)


@partial(jax.jit, static_argnames=("kernel_size", "stride", "padding", "images_per_step"))
def upsampling_block(x_nchw, w_bd, keep_mask, *, kernel_size, stride=1, padding=0,
                     images_per_step=1):
    """x_nchw: (N, C_in, H, W); w_bd: prepare_conv_weight output;
    keep_mask: (N, C_out) float 0/1 per-channel Dropout2d keep mask."""
    # TODO(synk): only stride=1 / padding=0 / output_size=None is implemented.
    assert stride == 1 and padding == 0
    N, C_in, H, W = x_nchw.shape
    K = kernel_size
    nb = images_per_step
    assert N % nb == 0
    G = N // nb
    C_out = w_bd.shape[0] // nb
    KKC = w_bd.shape[1] // nb
    assert KKC == C_in * K * K
    H_out = (H - 1) * stride - 2 * padding + K
    W_out = (W - 1) * stride - 2 * padding + K
    HW = H_out * W_out

    # im2col as ONE fused HLO (identity grouped conv); bf16 halves patch bytes
    # and feeds the MXU its native dtype.  Patch-axis ordering: ci*K*K + kh*K + kw.
    pad = K - 1 - padding
    patches = jax.lax.conv_general_dilated_patches(
        x_nchw.astype(jnp.bfloat16), (K, K), (1, 1), [(pad, pad), (pad, pad)])
    # (N, KKC, H_out, W_out) -> (G, nb*KKC, HW): leading/trailing reshapes, layout no-op.
    patches = patches.reshape(G, nb * KKC, HW)

    # Dropout2d(p=0.5): per-(image, channel) keep mask scaled by 1/(1-p) = 2.
    # TODO(synk): scale hard-coded for p=0.5 (the module's configuration).
    drop_scale = (keep_mask.astype(jnp.float32) * 2.0).reshape(G, nb * C_out, 1)

    out_flat = pl.pallas_call(
        upsampling_block_kernel,
        out_shape=jax.ShapeDtypeStruct((G, nb * C_out, HW), jnp.float32),
        grid_spec=pltpu.PrefetchScalarGridSpec(
            num_scalar_prefetch=0,
            grid=(G,),
            in_specs=[
                pl.BlockSpec((1, nb * KKC, HW), lambda g: (g, 0, 0)),
                pl.BlockSpec((nb * C_out, nb * KKC), lambda g: (0, 0)),  # resident weight
                pl.BlockSpec((1, nb * C_out, 1), lambda g: (g, 0, 0)),
            ],
            out_specs=pl.BlockSpec((1, nb * C_out, HW), lambda g: (g, 0, 0)),
        ),
        compiler_params=pltpu.CompilerParams(dimension_semantics=("parallel",)),
    )(patches, w_bd, drop_scale)

    # Trailing/leading-dim splits only: physically a no-op, output is already NCHW.
    return out_flat.reshape(N, C_out, H_out, W_out)


def reference(x_nchw, weight, bias, keep_mask, K):
    """Pure-JAX reference mirroring the PyTorch forward (same dropout mask).

    The conv consumes the same bf16-rounded x/weight that the kernel's MXU dot
    consumes (the declared precision choice); all arithmetic here is f32, and
    the bias IS applied — its exact cancellation by InstanceNorm is part of
    what this comparison validates.
    """
    N, C_in, H, W = x_nchw.shape
    C_out = weight.shape[1]
    x32 = x_nchw.astype(jnp.bfloat16).astype(jnp.float32)
    w32 = weight.astype(jnp.bfloat16).astype(jnp.float32)
    H_out, W_out = H + K - 1, W + K - 1
    y = jnp.zeros((N, C_out, H_out, W_out), jnp.float32)
    for kh in range(K):
        for kw in range(K):
            contrib = jnp.einsum('ncij,cd->ndij', x32, w32[:, :, kh, kw],
                                 precision=jax.lax.Precision.HIGHEST)
            y = y.at[:, :, kh:kh + H, kw:kw + W].add(contrib)
    y = y + bias[None, :, None, None]
    mean = y.mean(axis=(2, 3), keepdims=True)
    var = ((y - mean) ** 2).mean(axis=(2, 3), keepdims=True)
    y = (y - mean) * jax.lax.rsqrt(var + EPS)
    y = y * (keep_mask[:, :, None, None] * 2.0)
    return jnp.maximum(y, 0.0)


if __name__ == "__main__":
    # Module config: in_channels=4, out_channels=8, kernel_size=3,
    # stride=1, padding=0, normalize=True, dropout=True, output_size=None.
    N, C_in, C_out, H, W, K = 2, 4, 8, 16, 16, 3

    key = jax.random.PRNGKey(0)
    kx, kw, kb, kd = jax.random.split(key, 4)
    x = jax.random.normal(kx, (N, C_in, H, W), dtype=jnp.float32)
    weight = 0.1 * jax.random.normal(kw, (C_in, C_out, K, K), dtype=jnp.float32)
    bias = 0.1 * jax.random.normal(kb, (C_out,), dtype=jnp.float32)
    # Dropout2d(0.5): per-(n, channel) keep mask (training-mode semantics).
    keep_mask = jax.random.bernoulli(kd, 0.5, (N, C_out)).astype(jnp.float32)

    nb = images_per_step(N)
    # One-time (hoisted) weight prep; bias intentionally not passed to the kernel.
    w_bd = prepare_conv_weight(weight, kernel_size=K, images_per_step=nb)

    out = upsampling_block(x, w_bd, keep_mask, kernel_size=K, images_per_step=nb)
    out = jax.block_until_ready(out)

    ref = reference(x, weight, bias, keep_mask, K)
    assert out.shape == (N, C_out, H + K - 1, W + K - 1)
    assert jnp.allclose(out, ref, rtol=1e-4, atol=1e-4), "mismatch vs JAX reference"

    print("KERNEL_OK")
</pallas_src>

<mosaic_0001>
module attributes {stable_mosaic.version = 11 : i64} {
  func.func @upsampling_block_kernel(%arg0: i32, %arg1: memref<1x72x324xbf16, #tpu.memory_space<vmem>>, %arg2: memref<16x72xbf16, #tpu.memory_space<vmem>>, %arg3: memref<1x16x1xf32, #tpu.memory_space<vmem>>, %arg4: memref<1x16x324xf32, #tpu.memory_space<vmem>>) attributes {dimension_semantics = [#tpu.dimension_semantics<parallel>], iteration_bounds = array<i64: 1>, scalar_prefetch = 0 : i64, scratch_operands = 0 : i64, tpu.core_type = #tpu.core_type<tc>, window_params = [{transform_indices = @transform_0, window_bounds = array<i64: 1, 72, 324>}, {pipeline_mode = #tpu.pipeline_mode<synchronous>, transform_indices = @transform_1, window_bounds = array<i64: 16, 72>}, {transform_indices = @transform_2, window_bounds = array<i64: 1, 16, 1>}, {transform_indices = @transform_3, window_bounds = array<i64: 1, 16, 324>}]} {
    %c0 = arith.constant 0 : index
    %c0_0 = arith.constant 0 : index
    %0 = vector.load %arg2[%c0, %c0_0] : memref<16x72xbf16, #tpu.memory_space<vmem>>, vector<16x72xbf16>
    %c0_1 = arith.constant 0 : index
    %c0_2 = arith.constant 0 : index
    %c0_3 = arith.constant 0 : index
    %1 = vector.load %arg1[%c0_1, %c0_2, %c0_3] : memref<1x72x324xbf16, #tpu.memory_space<vmem>>, vector<1x72x324xbf16>
    %2 = vector.shape_cast %1 : vector<1x72x324xbf16> to vector<72x324xbf16>
    %cst = arith.constant dense<0.000000e+00> : vector<16x324xf32>
    %3 = tpu.matmul %0, %2, %cst {dimension_numbers = #tpu.dot_dimension_numbers<[1], [0], [0], [1], [0, 0, 1, 1], [], []>} : vector<16x72xbf16>, vector<72x324xbf16>, vector<16x324xf32> -> vector<16x324xf32>
    %cst_4 = arith.constant dense<0.000000e+00> : vector<16xf32>
    %4 = vector.multi_reduction <add>, %3, %cst_4 [1] : vector<16x324xf32> to vector<16xf32>
    %5 = vector.shape_cast %4 : vector<16xf32> to vector<16x1xf32>
    %cst_5 = arith.constant 0.00308641978 : f32
    %6 = vector.broadcast %cst_5 : f32 to vector<16x1xf32>
    %7 = arith.mulf %5, %6 : vector<16x1xf32>
    %8 = arith.mulf %3, %3 : vector<16x324xf32>
    %cst_6 = arith.constant dense<0.000000e+00> : vector<16xf32>
    %9 = vector.multi_reduction <add>, %8, %cst_6 [1] : vector<16x324xf32> to vector<16xf32>
    %10 = vector.shape_cast %9 : vector<16xf32> to vector<16x1xf32>
    %cst_7 = arith.constant 0.00308641978 : f32
    %11 = vector.broadcast %cst_7 : f32 to vector<16x1xf32>
    %12 = arith.mulf %10, %11 : vector<16x1xf32>
    %13 = arith.mulf %7, %7 : vector<16x1xf32>
    %14 = arith.subf %12, %13 : vector<16x1xf32>
    %cst_8 = arith.constant 0.000000e+00 : f32
    %15 = vector.broadcast %cst_8 : f32 to vector<16x1xf32>
    %16 = arith.maximumf %14, %15 : vector<16x1xf32>
    %cst_9 = arith.constant 9.99999974E-6 : f32
    %17 = vector.broadcast %cst_9 : f32 to vector<16x1xf32>
    %18 = arith.addf %16, %17 : vector<16x1xf32>
    %19 = math.rsqrt %18 : vector<16x1xf32>
    %c0_10 = arith.constant 0 : index
    %c0_11 = arith.constant 0 : index
    %c0_12 = arith.constant 0 : index
    %20 = vector.load %arg3[%c0_10, %c0_11, %c0_12] : memref<1x16x1xf32, #tpu.memory_space<vmem>>, vector<1x16x1xf32>
    %21 = vector.shape_cast %20 : vector<1x16x1xf32> to vector<16x1xf32>
    %22 = arith.mulf %19, %21 : vector<16x1xf32>
    %23 = vector.broadcast %7 : vector<16x1xf32> to vector<16x324xf32>
    %24 = arith.subf %3, %23 : vector<16x324xf32>
    %25 = vector.broadcast %22 : vector<16x1xf32> to vector<16x324xf32>
    %26 = arith.mulf %24, %25 : vector<16x324xf32>
    %cst_13 = arith.constant 0.000000e+00 : f32
    %27 = vector.broadcast %cst_13 : f32 to vector<16x324xf32>
    %28 = arith.maximumf %26, %27 : vector<16x324xf32>
    %c0_14 = arith.constant 0 : index
    %c0_15 = arith.constant 0 : index
    %c0_16 = arith.constant 0 : index
    %29 = vector.load %arg4[%c0_14, %c0_15, %c0_16] : memref<1x16x324xf32, #tpu.memory_space<vmem>>, vector<1x16x324xf32>
    %30 = vector.shape_cast %29 : vector<1x16x324xf32> to vector<16x324xf32>
    %31 = vector.shape_cast %28 : vector<16x324xf32> to vector<1x16x324xf32>
    tpu.vector_store %arg4[%c0_14, %c0_15, %c0_16], %31 {strides = array<i32>} : memref<1x16x324xf32, #tpu.memory_space<vmem>>, vector<1x16x324xf32>,
    return
  }
  func.func @transform_0(%arg0: i32) -> (i32, i32, i32) {
    %c0_i32 = arith.constant 0 : i32
    %c0_i32_0 = arith.constant 0 : i32
    %c0_i32_1 = arith.constant 0 : i32
    return %arg0, %c0_i32, %c0_i32_0 : i32, i32, i32
  }
  func.func @transform_1(%arg0: i32) -> (i32, i32) {
    %c0_i32 = arith.constant 0 : i32
    %c0_i32_0 = arith.constant 0 : i32
    %c0_i32_1 = arith.constant 0 : i32
    return %c0_i32, %c0_i32_0 : i32, i32
  }
  func.func @transform_2(%arg0: i32) -> (i32, i32, i32) {
    %c0_i32 = arith.constant 0 : i32
    %c0_i32_0 = arith.constant 0 : i32
    %c0_i32_1 = arith.constant 0 : i32
    return %arg0, %c0_i32, %c0_i32_0 : i32, i32, i32
  }
  func.func @transform_3(%arg0: i32) -> (i32, i32, i32) {
    %c0_i32 = arith.constant 0 : i32
    %c0_i32_0 = arith.constant 0 : i32
    %c0_i32_1 = arith.constant 0 : i32
    return %arg0, %c0_i32, %c0_i32_0 : i32, i32, i32
  }
}

</mosaic_0001>

<llo_original>
// kernel: upsampling_block.1
$region0: #{upsampling_block.1}
  #allocation0 [shape = 'u32[]', space=smem, size = 0x4, offset = 0x4, fixed_abs, tag = 'smem constant byte address 0x4 - core index']
  #allocation1 [shape = 'u32[144,128]{1,0:T(1,128)}', space=vmem, size = 0x12000, scoped, tag = 'internal scratch']
  %s0 = inlined_call_operand.vmem [shape: bf16[1,72,324], index: 0, kind: input, shape index: {}]
  %s1 = inlined_call_operand.vmem [shape: bf16[16,72], index: 1, kind: input, shape index: {}]
  %s2 = inlined_call_operand.vmem [shape: f32[1,16,1], index: 2, kind: input, shape index: {}]
  %s3 = inlined_call_operand.vmem [shape: f32[1,16,324], index: 3, kind: output, shape index: {}]
  %s4 = sld [smem:[#allocation0]]
  $region22: #{upsampling_block.1} parent=0
    _
  %s6 = ssub.s32 1, %s4
  %s7 = scalar_select 0, %s6, %s4
  // Predicated region
  $region2: #{upsampling_block.1} parent=0 // pred_check
    _
  $region3: #{upsampling_block.1} parent=0 // pred_check_branch
    %9 = sbr.rel (0) target = $region5
  $region4: #{upsampling_block.1} parent=0 // pred_region
    _
  $region5: #{upsampling_block.1} parent=0 // pred_fallthru
    _
  // Predicated region
  $region6: #{upsampling_block.1} parent=0 // pred_check
    _
  $region7: #{upsampling_block.1} parent=0 // pred_check_branch
    %11 = sbr.rel (0) target = $region9
  $region8: #{upsampling_block.1} parent=0 // pred_region
    _
  $region9: #{upsampling_block.1} parent=0 // pred_fallthru
    _
  // Predicated region
  $region10: #{upsampling_block.1} parent=0 // pred_check
    _
  $region11: #{upsampling_block.1} parent=0 // pred_check_branch
    %13 = sbr.rel (0) target = $region13
  $region12: #{upsampling_block.1} parent=0 // pred_region
    _
  $region13: #{upsampling_block.1} parent=0 // pred_fallthru
    _
  %v15 = vld [vmem:[%s1] sm:$0xf]
  %v16 = vld [vmem:[%s1 + $0x4] sm:$0xf]
  %v17 = vld [vmem:[%s0] sm:$0xff]
  %v18 = vld [vmem:[%s0 + $0x8] sm:$0xf]
  %v19 = vld [vmem:[%s0 + $0xc] sm:$0xff]
  %v20 = vld [vmem:[%s0 + $0x14] sm:$0xf]
  %v21 = vld [vmem:[%s0 + $0x18] sm:$0xff]
  %v22 = vld [vmem:[%s0 + $0x20] sm:$0xf]
  %v23 = vld [vmem:[%s0 + $0x24] sm:$0xff]
  %v24 = vld [vmem:[%s0 + $0x2c] sm:$0xf]
  %v25 = vld [vmem:[%s0 + $0x30] sm:$0xff]
  %v26 = vld [vmem:[%s0 + $0x38] sm:$0xf]
  %v27 = vld [vmem:[%s0 + $0x3c] sm:$0xff]
  %v28 = vld [vmem:[%s0 + $0x44] sm:$0xf]
  %v29 = vld [vmem:[%s0 + $0x48] sm:$0xff]
  %v30 = vld [vmem:[%s0 + $0x50] sm:$0xf]
  %v31 = vld [vmem:[%s0 + $0x54] sm:$0xff]
  %v32 = vld [vmem:[%s0 + $0x5c] sm:$0xf]
  %v33 = vld [vmem:[%s0 + $0x60] sm:$0xff]
  %v34 = vld [vmem:[%s0 + $0x68] sm:$0xf]
  %v37 = vunpack.c.l.b16 %v15
  %v38 = vunpack.c.l.b16 %v16
  %v39 = vpack.c.b16 %v38, %v37
  %v58 = vunpack.c.l.b16 %v17
  %v59 = vunpack.c.h.b16 %v17
  %v60 = vunpack.c.l.b16 %v18
  %v61 = vunpack.c.l.b16 %v19
  %v62 = vunpack.c.h.b16 %v19
  %v63 = vunpack.c.l.b16 %v20
  %v64 = vunpack.c.l.b16 %v21
  %v65 = vunpack.c.h.b16 %v21
  %v66 = vunpack.c.l.b16 %v22
  %v67 = vunpack.c.l.b16 %v23
  %v68 = vunpack.c.h.b16 %v23
  %v69 = vunpack.c.l.b16 %v24
  %v70 = vunpack.c.l.b16 %v25
  %v71 = vunpack.c.h.b16 %v25
  %v72 = vunpack.c.l.b16 %v26
  %v73 = vunpack.c.l.b16 %v27
  %v74 = vunpack.c.h.b16 %v27
  %v75 = vunpack.c.l.b16 %v28
  %v76 = vunpack.c.l.b16 %v29
  %v77 = vunpack.c.h.b16 %v29
  %v78 = vunpack.c.l.b16 %v30
  %v79 = vunpack.c.l.b16 %v31
  %v80 = vunpack.c.h.b16 %v31
  %v81 = vunpack.c.l.b16 %v32
  %v82 = vunpack.c.l.b16 %v33
  %v83 = vunpack.c.h.b16 %v33
  %v84 = vunpack.c.l.b16 %v34
  %v85 = vpack.c.b16 %v61, %v58
  %v86 = vpack.c.b16 %v62, %v59
  %v87 = vpack.c.b16 %v63, %v60
  %v88 = vpack.c.b16 %v67, %v64
  %v89 = vpack.c.b16 %v68, %v65
  %v90 = vpack.c.b16 %v69, %v66
  %v91 = vpack.c.b16 %v73, %v70
  %v92 = vpack.c.b16 %v74, %v71
  %v93 = vpack.c.b16 %v75, %v72
  %v94 = vpack.c.b16 %v79, %v76
  %v95 = vpack.c.b16 %v80, %v77
  %v96 = vpack.c.b16 %v81, %v78
  %v97 = vpack.c.b16 %v82, %v82
  %v98 = vpack.c.b16 %v83, %v83
  %v99 = vpack.c.b16 %v84, %v84
  %vm112 = vcmask 588800
  %v114 = vsel %vm112, %v39, 0
  %vm116 = vcmask 1043456
  %v118 = vsel %vm116, %v97, 0
  %v121 = vsel %vm116, %v98, 0
  %v124 = vsel %vm116, %v99, 0
  %126 = vmatprep.subr.bf16.mxu0 %v86
  %127 = vmatpush1.bf16.msra.mxu0 %v85
  %128 = vmatprep.subr.bf16.mxu0 %v89
  %129 = vmatpush1.bf16.msra.mxu0 %v88
  %130 = vmatprep.subr.bf16.mxu0 %v92
  %131 = vmatpush1.bf16.msra.mxu0 %v91
  %132 = vmatprep.subr.bf16.mxu0 %v95
  %133 = vmatpush1.bf16.msra.mxu0 %v94
  %134 = vmatprep.subr.bf16.mxu0 %v121
  %135 = vmatpush1.bf16.msra.mxu0 %v118
  %136 = vmatprep.subr.bf16.mxu0 0
  %137 = vmatpush1.bf16.msra.mxu0 0
  %138 = vmatprep.subr.bf16.mxu0 0
  %139 = vmatpush1.bf16.msra.mxu0 0
  %140 = vmatprep.subr.bf16.mxu0 0
  %141 = vmatpush1.bf16.msra.mxu0 0
  %142 = vmatprep.subr.bf16.mxu0 0
  %143 = vmatpush1.bf16.msra.mxu0 0
  %144 = vmatprep.subr.bf16.mxu0 0
  %145 = vmatpush1.bf16.msra.mxu0 0
  %146 = vmatprep.subr.bf16.mxu0 0
  %147 = vmatpush1.bf16.msra.mxu0 0
  %148 = vmatprep.subr.bf16.mxu0 0
  %149 = vmatpush1.bf16.msra.mxu0 0
  %150 = vmatprep.subr.bf16.mxu0 0
  %151 = vmatpush1.bf16.msra.mxu0 0
  %152 = vmatprep.subr.bf16.mxu0 0
  %153 = vmatpush1.bf16.msra.mxu0 0
  %154 = vmatprep.subr.bf16.mxu0 0
  %155 = vmatpush1.bf16.msra.mxu0 0
  %156 = vmatprep.subr.bf16.mxu0 0
  %157 = vmatpush1.bf16.msra.mxu0 0
  %158 = vmatprep.mubr.bf16.mxu0 0
  %159 = vmatmul.mubr.bf16.gmra.mrb[0].mxu0 %v114
  %v160 = vpop.f32.mrb[0].mxu0
  %v161 = vadd.f32 0.0, %v160
  %v162 = vpop.f32.mrb[0].mxu0
  %v163 = vadd.f32 0.0, %v162
  %v164 = vpop.f32.mrb[0].mxu0
  %v165 = vadd.f32 0.0, %v164
  %v166 = vpop.f32.mrb[0].mxu0
  %v167 = vadd.f32 0.0, %v166
  %168 = vdwg.mxu0
  %169 = vmatprep.subr.bf16.mxu0 0
  %170 = vmatpush1.bf16.msra.mxu0 %v87
  %171 = vmatprep.subr.bf16.mxu0 0
  %172 = vmatpush1.bf16.msra.mxu0 %v90
  %173 = vmatprep.subr.bf16.mxu0 0
  %174 = vmatpush1.bf16.msra.mxu0 %v93
  %175 = vmatprep.subr.bf16.mxu0 0
  %176 = vmatpush1.bf16.msra.mxu0 %v96
  %177 = vmatprep.subr.bf16.mxu0 0
  %178 = vmatpush1.bf16.msra.mxu0 %v124
  %179 = vmatprep.subr.bf16.mxu0 0
  %180 = vmatpush1.bf16.msra.mxu0 0
  %181 = vmatprep.subr.bf16.mxu0 0
  %182 = vmatpush1.bf16.msra.mxu0 0
  %183 = vmatprep.subr.bf16.mxu0 0
  %184 = vmatpush1.bf16.msra.mxu0 0
  %185 = vmatprep.subr.bf16.mxu0 0
  %186 = vmatpush1.bf16.msra.mxu0 0
  %187 = vmatprep.subr.bf16.mxu0 0
  %188 = vmatpush1.bf16.msra.mxu0 0
  %189 = vmatprep.subr.bf16.mxu0 0
  %190 = vmatpush1.bf16.msra.mxu0 0
  %191 = vmatprep.subr.bf16.mxu0 0
  %192 = vmatpush1.bf16.msra.mxu0 0
  %193 = vmatprep.subr.bf16.mxu0 0
  %194 = vmatpush1.bf16.msra.mxu0 0
  %195 = vmatprep.subr.bf16.mxu0 0
  %196 = vmatpush1.bf16.msra.mxu0 0
  %197 = vmatprep.subr.bf16.mxu0 0
  %198 = vmatpush1.bf16.msra.mxu0 0
  %199 = vmatprep.subr.bf16.mxu0 0
  %200 = vmatpush1.bf16.msra.mxu0 0
  %201 = vmatprep.mubr.bf16.mxu0 0
  %202 = vmatmul.mubr.bf16.gmra.mrb[0].mxu0 %v114
  %v203 = vpop.f32.mrb[0].mxu0
  %v204 = vadd.f32 0.0, %v203
  %v205 = vpop.f32.mrb[0].mxu0
  %v206 = vpop.f32.mrb[0].mxu0
  %v207 = vadd.f32 0.0, %v206
  %v208 = vpop.f32.mrb[0].mxu0
  %209 = vdwg.mxu0
  %v210 = vadd.f32 %v161, %v163
  %vm211 = vcmask 556032
  %v212 = vsel %vm211, %v204, 0.0
  %v213 = vadd.f32 %v210, %v212
  %214 = vadd.xlane.f32.xlu0 %v213
  %v215 = vpop.xlane.xlu0 %214
  %v216 = vadd.f32 %v165, %v167
  %v217 = vsel %vm211, %v207, 0.0
  %v218 = vadd.f32 %v216, %v217
  %219 = vadd.xlane.f32.xlu0 %v218
  %v220 = vpop.xlane.xlu0 %219
  %v221 = vmul.f32 %v215, 0.0030864198
  %v222 = vmul.f32 %v220, 0.0030864198
  %v223 = vmul.f32 %v161, %v161
  %v224 = vmul.f32 %v163, %v163
  %v225 = vmul.f32 %v204, %v204
  %v226 = vmul.f32 %v165, %v165
  %v227 = vmul.f32 %v167, %v167
  %v228 = vmul.f32 %v207, %v207
  %v229 = vadd.f32 %v223, %v224
  %v230 = vsel %vm211, %v225, 0.0
  %v231 = vadd.f32 %v229, %v230
  %232 = vadd.xlane.f32.xlu0 %v231
  %v233 = vpop.xlane.xlu0 %232
  %v234 = vadd.f32 %v226, %v227
  %v235 = vsel %vm211, %v228, 0.0
  %v236 = vadd.f32 %v234, %v235
  %237 = vadd.xlane.f32.xlu0 %v236
  %v238 = vpop.xlane.xlu0 %237
  %v239 = vmul.f32 %v233, 0.0030864198
  %v240 = vmul.f32 %v238, 0.0030864198
  %v241 = vmul.f32 %v221, %v221
  %v242 = vmul.f32 %v222, %v222
  %v243 = vsub.f32 %v239, %v241
  %v244 = vsub.f32 %v240, %v242
  %v245 = vmax.f32 %v243, 0.0
  %v246 = vmax.f32 %v244, 0.0
  %v247 = vadd.f32 %v245, 1e-05
  %v248 = vadd.f32 %v246, 1e-05
  %v249 = vrsqrt.pop %v247
  %v250 = vrsqrt.pop %v248
  %v251 = vld [vmem:[%s2] sm:$0xff]
  %v252 = vld [vmem:[%s2 + $0x8] sm:$0xff]
  %v253 = vmul.f32 %v249, %v251
  %v254 = vmul.f32 %v250, %v252
  %v255 = vsub.f32 %v161, %v221
  %v256 = vsub.f32 %v163, %v221
  %v257 = vsub.f32 %v204, %v221
  %v258 = vsub.f32 %v165, %v222
  %v259 = vsub.f32 %v167, %v222
  %v260 = vsub.f32 %v207, %v222
  %262 = vset.pattern.permute.xlu0 0
  %263 = vperm.xlu0 %262, %v253
  %v264 = vpop.permute.xlu0 %263
  %267 = vset.pattern.permute.xlu0 0
  %268 = vperm.xlu0 %267, %v254
  %v269 = vpop.permute.xlu0 %268
  %v271 = vmul.f32 %v255, %v264
  %v272 = vmul.f32 %v256, %v264
  %v273 = vmul.f32 %v257, %v264
  %v274 = vmul.f32 %v258, %v269
  %v275 = vmul.f32 %v259, %v269
  %v276 = vmul.f32 %v260, %v269
  %v277 = vmax.f32 %v271, 0.0
  %v278 = vmax.f32 %v272, 0.0
  %v279 = vmax.f32 %v273, 0.0
  %v280 = vmax.f32 %v274, 0.0
  %v281 = vmax.f32 %v275, 0.0
  %v282 = vmax.f32 %v276, 0.0
  %283 = vst [vmem:[%s3] sm:$0xff] %v277
  %284 = vst [vmem:[%s3 + $0x8] sm:$0xff] %v278
  %285 = vst.msk [vmem:[%s3 + $0x10] sm:$0xff] %vm211, %v279
  %286 = vst [vmem:[%s3 + $0x18] sm:$0xff] %v280
  %287 = vst [vmem:[%s3 + $0x20] sm:$0xff] %v281
  %288 = vst.msk [vmem:[%s3 + $0x28] sm:$0xff] %vm211, %v282
  // Predicated region
  $region14: #{upsampling_block.1} parent=0 // pred_check
    _
  $region15: #{upsampling_block.1} parent=0 // pred_check_branch
    %290 = sbr.rel (0) target = $region17
  $region16: #{upsampling_block.1} parent=0 // pred_region
    _
  $region17: #{upsampling_block.1} parent=0 // pred_fallthru
    _
  // Predicated region
  $region18: #{upsampling_block.1} parent=0 // pred_check
    _
  $region19: #{upsampling_block.1} parent=0 // pred_check_branch
    %292 = sbr.rel (0) target = $region21
  $region20: #{upsampling_block.1} parent=0 // pred_region
    _
  $region21: #{upsampling_block.1} parent=0 // pred_fallthru
    _

</llo_original>
